<compile_context>
chip_gen: v7x
topology: tpu7x:2x2x1
jax: 0.10.0
libtpu: 0.0.40
codegen_flags: <defaults>
</compile_context>

<pallas_src>
import jax
import jax.numpy as jnp
from jax.experimental import pallas as pl
from jax.experimental.pallas import tpu as pltpu

LN_EPS = 1e-5  # torch.nn.LayerNorm default


def _round_up(x: int, m: int) -> int:
    return ((x + m - 1) // m) * m


def _vmem_budget_bytes() -> int:
    """~3/4 of physical VMEM: ~96 MiB on v5e/v6e (128 MiB), ~48 MiB on v7x (64 MiB)."""
    try:
        cap = int(pltpu.get_tpu_info().vmem_capacity_bytes)
    except Exception:
        cap = 64 * 1024 * 1024  # conservative fallback (v7x per-TC size)
    return (cap * 3) // 4


def _layernorm_epilogue(h, gamma, beta):
    """LayerNorm over the last dim with single-pass statistics (h is f32)."""
    inv_n = 1.0 / h.shape[-1]                       # hoisted constant (true out_size)
    s1 = jnp.sum(h, axis=-1, keepdims=True)
    s2 = jnp.sum(h * h, axis=-1, keepdims=True)
    mean = s1 * inv_n
    var = jnp.maximum(s2 * inv_n - mean * mean, 0.0)
    inv_std = jax.lax.rsqrt(var + LN_EPS)           # EUP slot
    return (h - mean) * inv_std * gamma + beta


def fc_resident_kernel(x_ref, w_ref, b_ref, g_ref, be_ref, o_ref):
    """Full-K path: W [K, N] block index is constant -> DMA'd once per call."""
    h = jnp.dot(x_ref[...], w_ref[...], preferred_element_type=jnp.float32)
    h = jnp.maximum(h + b_ref[...], 0.0)            # bias + ReLU
    o_ref[...] = _layernorm_epilogue(h, g_ref[...], be_ref[...]).astype(o_ref.dtype)


def fc_streaming_kernel(x_ref, w_ref, b_ref, g_ref, be_ref, o_ref):
    """K-tiled path: accumulate directly into the resident f32 output block."""
    k = pl.program_id(1)

    @pl.when(k == 0)
    def _():
        o_ref[...] = jnp.zeros_like(o_ref)

    o_ref[...] += jnp.dot(x_ref[...], w_ref[...], preferred_element_type=jnp.float32)

    @pl.when(k == pl.num_programs(1) - 1)
    def _():
        h = jnp.maximum(o_ref[...] + b_ref[...], 0.0)   # bias + ReLU
        o_ref[...] = _layernorm_epilogue(h, g_ref[...], be_ref[...]).astype(o_ref.dtype)


def fully_connected_layer(x, weight, bias, gamma, beta, *, use_bf16_matmul=False):
    """x: [B, input_size]; weight: [output_size, input_size] (PyTorch layout);
    bias/gamma/beta: [output_size]. Returns [B, output_size] float32."""
    B, in_size = x.shape
    out_size, wk = weight.shape
    assert wk == in_size

    itemsize = 2 if use_bf16_matmul else 4
    budget = _vmem_budget_bytes()
    physical = (budget * 4) // 3
    param_bytes = 6 * out_size * 4                     # bias/gamma/beta (small)

    # ---- K alignment (lane-dense MXU feed; zero padding is benign) ---------
    K_align = _round_up(in_size, 128)

    # ---- weight residency decision -----------------------------------------
    resident = 2 * K_align * out_size * itemsize <= budget // 3
    TK = K_align if resident else min(512, K_align)

    def fits(tm, tk):
        return (2 * tm * tk * itemsize                 # x  (double-buffered)
                + 2 * tk * out_size * itemsize         # W  (double-buffered, worst case)
                + 2 * tm * out_size * 4                # output block (f32)
                + param_bytes) <= budget

    # ---- batch tile: grow to fill VMEM, shrink to fit -----------------------
    TM = min(1024, _round_up(B, 8))
    while not fits(TM, TK) and TM > 8:
        TM = max(8, _round_up(TM // 2, 8) if TM // 2 >= 8 else 8)
        if _round_up(TM, 8) != TM:
            TM = _round_up(TM, 8)
    # Still over budget: shrink the K tile (forces the streaming path).
    while not fits(TM, TK) and TK > 128:
        resident = False
        TK = max(128, _round_up(TK // 2, 128))

    if resident:
        # v7x megacore: give the "parallel" batch axis >= 2 tiles when the batch
        # is big enough (free here: W is loaded exactly once regardless of TM).
        while TM > 8 and _round_up(B, TM) // TM < 2:
            new_tm = max(8, _round_up(TM // 2, 8))
            if new_tm >= TM:
                break
            TM = new_tm

    K_pad = _round_up(K_align, TK)
    B_pad = _round_up(B, TM)

    # ---- HBM-side (one-time, amortized) layout prep -------------------------
    w_t = weight.T                                     # [K, N]: K on sublane, N on lane
    if K_pad != in_size:
        x = jnp.pad(x, ((0, 0), (0, K_pad - in_size)))
        w_t = jnp.pad(w_t, ((0, K_pad - in_size), (0, 0)))
    if B_pad != B:
        x = jnp.pad(x, ((0, B_pad - B), (0, 0)))
    if use_bf16_matmul:
        x = x.astype(jnp.bfloat16)
        w_t = w_t.astype(jnp.bfloat16)

    b2 = bias.reshape(1, out_size).astype(jnp.float32)
    g2 = gamma.reshape(1, out_size).astype(jnp.float32)
    be2 = beta.reshape(1, out_size).astype(jnp.float32)

    tile_bytes = (2 * TM * TK * itemsize + 2 * TK * out_size * itemsize
                  + 2 * TM * out_size * 4 + param_bytes)
    vmem_limit = int(min(max(32 << 20, tile_bytes + (8 << 20)),
                         max(32 << 20, physical - (8 << 20))))

    if resident:
        grid = (B_pad // TM,)
        kernel = fc_resident_kernel
        in_specs = [
            pl.BlockSpec((TM, K_pad), lambda i: (i, 0)),            # x
            pl.BlockSpec((K_pad, out_size), lambda i: (0, 0)),      # W (loaded once)
            pl.BlockSpec((1, out_size), lambda i: (0, 0)),          # bias
            pl.BlockSpec((1, out_size), lambda i: (0, 0)),          # gamma
            pl.BlockSpec((1, out_size), lambda i: (0, 0)),          # beta
        ]
        out_specs = pl.BlockSpec((TM, out_size), lambda i: (i, 0))
        dim_sem = ("parallel",)
        w_streams = 1
    else:
        grid = (B_pad // TM, K_pad // TK)
        kernel = fc_streaming_kernel
        in_specs = [
            pl.BlockSpec((TM, TK), lambda i, k: (i, k)),            # x
            pl.BlockSpec((TK, out_size), lambda i, k: (k, 0)),      # W (streamed)
            pl.BlockSpec((1, out_size), lambda i, k: (0, 0)),       # bias
            pl.BlockSpec((1, out_size), lambda i, k: (0, 0)),       # gamma
            pl.BlockSpec((1, out_size), lambda i, k: (0, 0)),       # beta
        ]
        out_specs = pl.BlockSpec((TM, out_size), lambda i, k: (i, 0))
        dim_sem = ("parallel", "arbitrary")
        w_streams = B_pad // TM                                     # W re-streamed per batch tile

    cost = pl.CostEstimate(
        flops=2 * B_pad * K_pad * out_size,
        transcendentals=B_pad,
        bytes_accessed=(B_pad * K_pad * itemsize
                        + w_streams * K_pad * out_size * itemsize
                        + B_pad * out_size * 4
                        + 3 * out_size * 4),
    )

    out = pl.pallas_call(
        kernel,
        out_shape=jax.ShapeDtypeStruct((B_pad, out_size), jnp.float32),
        grid_spec=pltpu.PrefetchScalarGridSpec(
            num_scalar_prefetch=0,
            grid=grid,
            in_specs=in_specs,
            out_specs=out_specs,
        ),
        compiler_params=pltpu.CompilerParams(
            dimension_semantics=dim_sem,
            vmem_limit_bytes=vmem_limit,
        ),
        cost_estimate=cost,
    )(x, w_t, b2, g2, be2)

    if B_pad != B:
        out = out[:B]
    return out


def _reference(x, weight, bias, gamma, beta):
    h = x @ weight.T + bias
    h = jnp.maximum(h, 0.0)
    mean = jnp.mean(h, axis=-1, keepdims=True)
    var = jnp.mean((h - mean) ** 2, axis=-1, keepdims=True)
    return (h - mean) / jnp.sqrt(var + LN_EPS) * gamma + beta


if __name__ == "__main__":
    key = jax.random.PRNGKey(0)
    B, input_size, output_size = 8, 32, 128

    k_x, k_w, k_b = jax.random.split(key, 3)
    x = jax.random.normal(k_x, (B, input_size), dtype=jnp.float32)

    # Deterministic parameter init (matches PyTorch Linear's uniform bound).
    bound = 1.0 / (input_size ** 0.5)
    weight = jax.random.uniform(k_w, (output_size, input_size),
                                minval=-bound, maxval=bound, dtype=jnp.float32)
    bias = jax.random.uniform(k_b, (output_size,),
                              minval=-bound, maxval=bound, dtype=jnp.float32)
    gamma = jnp.ones((output_size,), dtype=jnp.float32)   # LayerNorm weight
    beta = jnp.zeros((output_size,), dtype=jnp.float32)   # LayerNorm bias

    out = fully_connected_layer(x, weight, bias, gamma, beta)
    out = jax.block_until_ready(out)

    ref = _reference(x, weight, bias, gamma, beta)
    assert out.shape == (B, output_size)
    assert jnp.allclose(out, ref, atol=1e-4, rtol=1e-4)
    print("KERNEL_OK")
</pallas_src>

<mosaic_0001>
module attributes {stable_mosaic.version = 11 : i64} {
  func.func @fc_resident_kernel(%arg0: i32, %arg1: memref<8x128xf32, #tpu.memory_space<vmem>>, %arg2: memref<128x128xf32, #tpu.memory_space<vmem>>, %arg3: memref<1x128xf32, #tpu.memory_space<vmem>>, %arg4: memref<1x128xf32, #tpu.memory_space<vmem>>, %arg5: memref<1x128xf32, #tpu.memory_space<vmem>>, %arg6: memref<8x128xf32, #tpu.memory_space<vmem>>) attributes {dimension_semantics = [#tpu.dimension_semantics<parallel>], iteration_bounds = array<i64: 1>, scalar_prefetch = 0 : i64, scratch_operands = 0 : i64, tpu.core_type = #tpu.core_type<tc>, window_params = [{transform_indices = @transform_0, window_bounds = array<i64: 8, 128>}, {pipeline_mode = #tpu.pipeline_mode<synchronous>, transform_indices = @transform_1, window_bounds = array<i64: 128, 128>}, {pipeline_mode = #tpu.pipeline_mode<synchronous>, transform_indices = @transform_2, window_bounds = array<i64: 1, 128>}, {pipeline_mode = #tpu.pipeline_mode<synchronous>, transform_indices = @transform_3, window_bounds = array<i64: 1, 128>}, {pipeline_mode = #tpu.pipeline_mode<synchronous>, transform_indices = @transform_4, window_bounds = array<i64: 1, 128>}, {transform_indices = @transform_5, window_bounds = array<i64: 8, 128>}]} {
    %c0 = arith.constant 0 : index
    %c0_0 = arith.constant 0 : index
    %0 = vector.load %arg1[%c0, %c0_0] : memref<8x128xf32, #tpu.memory_space<vmem>>, vector<8x128xf32>
    %c0_1 = arith.constant 0 : index
    %c0_2 = arith.constant 0 : index
    %1 = vector.load %arg2[%c0_1, %c0_2] : memref<128x128xf32, #tpu.memory_space<vmem>>, vector<128x128xf32>
    %cst = arith.constant dense<0.000000e+00> : vector<8x128xf32>
    %2 = tpu.matmul %0, %1, %cst {dimension_numbers = #tpu.dot_dimension_numbers<[1], [0], [0], [1], [0, 0, 1, 1], [], []>} : vector<8x128xf32>, vector<128x128xf32>, vector<8x128xf32> -> vector<8x128xf32>
    %c0_3 = arith.constant 0 : index
    %c0_4 = arith.constant 0 : index
    %3 = vector.load %arg3[%c0_3, %c0_4] : memref<1x128xf32, #tpu.memory_space<vmem>>, vector<1x128xf32>
    %4 = vector.broadcast %3 : vector<1x128xf32> to vector<8x128xf32>
    %5 = arith.addf %2, %4 : vector<8x128xf32>
    %cst_5 = arith.constant 0.000000e+00 : f32
    %6 = vector.broadcast %cst_5 : f32 to vector<8x128xf32>
    %7 = arith.maximumf %5, %6 : vector<8x128xf32>
    %c0_6 = arith.constant 0 : index
    %c0_7 = arith.constant 0 : index
    %8 = vector.load %arg4[%c0_6, %c0_7] : memref<1x128xf32, #tpu.memory_space<vmem>>, vector<1x128xf32>
    %c0_8 = arith.constant 0 : index
    %c0_9 = arith.constant 0 : index
    %9 = vector.load %arg5[%c0_8, %c0_9] : memref<1x128xf32, #tpu.memory_space<vmem>>, vector<1x128xf32>
    %cst_10 = arith.constant dense<0.000000e+00> : vector<8xf32>
    %10 = vector.multi_reduction <add>, %7, %cst_10 [1] : vector<8x128xf32> to vector<8xf32>
    %11 = vector.shape_cast %10 : vector<8xf32> to vector<8x1xf32>
    %12 = arith.mulf %7, %7 : vector<8x128xf32>
    %cst_11 = arith.constant dense<0.000000e+00> : vector<8xf32>
    %13 = vector.multi_reduction <add>, %12, %cst_11 [1] : vector<8x128xf32> to vector<8xf32>
    %14 = vector.shape_cast %13 : vector<8xf32> to vector<8x1xf32>
    %cst_12 = arith.constant 7.812500e-03 : f32
    %15 = vector.broadcast %cst_12 : f32 to vector<8x1xf32>
    %16 = arith.mulf %11, %15 : vector<8x1xf32>
    %cst_13 = arith.constant 7.812500e-03 : f32
    %17 = vector.broadcast %cst_13 : f32 to vector<8x1xf32>
    %18 = arith.mulf %14, %17 : vector<8x1xf32>
    %19 = arith.mulf %16, %16 : vector<8x1xf32>
    %20 = arith.subf %18, %19 : vector<8x1xf32>
    %cst_14 = arith.constant 0.000000e+00 : f32
    %21 = vector.broadcast %cst_14 : f32 to vector<8x1xf32>
    %22 = arith.maximumf %20, %21 : vector<8x1xf32>
    %cst_15 = arith.constant 9.99999974E-6 : f32
    %23 = vector.broadcast %cst_15 : f32 to vector<8x1xf32>
    %24 = arith.addf %22, %23 : vector<8x1xf32>
    %25 = math.rsqrt %24 : vector<8x1xf32>
    %26 = vector.broadcast %16 : vector<8x1xf32> to vector<8x128xf32>
    %27 = arith.subf %7, %26 : vector<8x128xf32>
    %28 = vector.broadcast %25 : vector<8x1xf32> to vector<8x128xf32>
    %29 = arith.mulf %27, %28 : vector<8x128xf32>
    %30 = vector.broadcast %8 : vector<1x128xf32> to vector<8x128xf32>
    %31 = arith.mulf %29, %30 : vector<8x128xf32>
    %32 = vector.broadcast %9 : vector<1x128xf32> to vector<8x128xf32>
    %33 = arith.addf %31, %32 : vector<8x128xf32>
    %c0_16 = arith.constant 0 : index
    %c0_17 = arith.constant 0 : index
    %34 = vector.load %arg6[%c0_16, %c0_17] : memref<8x128xf32, #tpu.memory_space<vmem>>, vector<8x128xf32>
    tpu.vector_store %arg6[%c0_16, %c0_17], %33 {strides = array<i32>} : memref<8x128xf32, #tpu.memory_space<vmem>>, vector<8x128xf32>,
    return
  }
  func.func @transform_0(%arg0: i32) -> (i32, i32) {
    %c0_i32 = arith.constant 0 : i32
    %c0_i32_0 = arith.constant 0 : i32
    return %arg0, %c0_i32 : i32, i32
  }
  func.func @transform_1(%arg0: i32) -> (i32, i32) {
    %c0_i32 = arith.constant 0 : i32
    %c0_i32_0 = arith.constant 0 : i32
    %c0_i32_1 = arith.constant 0 : i32
    return %c0_i32, %c0_i32_0 : i32, i32
  }
  func.func @transform_2(%arg0: i32) -> (i32, i32) {
    %c0_i32 = arith.constant 0 : i32
    %c0_i32_0 = arith.constant 0 : i32
    %c0_i32_1 = arith.constant 0 : i32
    return %c0_i32, %c0_i32_0 : i32, i32
  }
  func.func @transform_3(%arg0: i32) -> (i32, i32) {
    %c0_i32 = arith.constant 0 : i32
    %c0_i32_0 = arith.constant 0 : i32
    %c0_i32_1 = arith.constant 0 : i32
    return %c0_i32, %c0_i32_0 : i32, i32
  }
  func.func @transform_4(%arg0: i32) -> (i32, i32) {
    %c0_i32 = arith.constant 0 : i32
    %c0_i32_0 = arith.constant 0 : i32
    %c0_i32_1 = arith.constant 0 : i32
    return %c0_i32, %c0_i32_0 : i32, i32
  }
  func.func @transform_5(%arg0: i32) -> (i32, i32) {
    %c0_i32 = arith.constant 0 : i32
    %c0_i32_0 = arith.constant 0 : i32
    return %arg0, %c0_i32 : i32, i32
  }
}

</mosaic_0001>

<llo_original>
// kernel: tpu_custom_call.1
$region0: #{tpu_custom_call.1}
  #allocation0 [shape = 'u32[]', space=smem, size = 0x4, offset = 0x4, fixed_abs, tag = 'smem constant byte address 0x4 - core index']
  #allocation1 [shape = 'u32[144,128]{1,0:T(1,128)}', space=vmem, size = 0x12000, scoped, tag = 'internal scratch']
  %s0 = inlined_call_operand.hbm [shape: f32[8,128], index: 0, kind: input, shape index: {}]
  %s1 = inlined_call_operand.hbm [shape: f32[128,128], index: 1, kind: input, shape index: {}]
  %s2 = inlined_call_operand.vmem [shape: f32[1,128], index: 2, kind: input, shape index: {}]
  %s3 = inlined_call_operand.vmem [shape: f32[1,128], index: 3, kind: input, shape index: {}]
  %s4 = inlined_call_operand.vmem [shape: f32[1,128], index: 4, kind: input, shape index: {}]
  %s5 = inlined_call_operand.hbm [shape: f32[8,128], index: 5, kind: output, shape index: {}]
  %s6 = sld [smem:[#allocation0]]
  $region38: #{tpu_custom_call.1} parent=0
    _
  %s8 = ssub.s32 1, %s6
  %s9 = scalar_select 0, %s8, %s6
  $region1: #{tpu_custom_call.1} parent=0
    #allocation2 [shape = 'u8[4096]{0}', space=vmem, size = 0x1000, scoped, tag = 'input window, operand 0, single buffered']
    #allocation3 [shape = 's32[1]{0}', space=sflag, size = 0x4, scoped, tag = 'scoped memory for tpu_custom_call.1']
    #allocation4 [shape = 's32[1]{0}', space=sflag, size = 0x4, scoped, tag = 'scoped memory for tpu_custom_call.1']
    #allocation5 [shape = 'u8[65536]{0}', space=vmem, size = 0x10000, scoped, tag = 'input window, operand 1, single buffered']
    #allocation6 [shape = 's32[1]{0}', space=sflag, size = 0x4, scoped, tag = 'scoped memory for tpu_custom_call.1']
    #allocation7 [shape = 'u8[4096]{0}', space=vmem, size = 0x1000, scoped, tag = 'output window, operand 0, single buffered']
    %10 = vsyncpa [#allocation3], 0
    %11 = vsyncpa [#allocation6], 0
    %12 = vsyncpa [#allocation4], 0
    // Predicated region
    $region2: #{tpu_custom_call.1} parent=1 // pred_check
      _
    $region3: #{tpu_custom_call.1} parent=1 // pred_check_branch
      %14 = sbr.rel (0) target = $region5
    $region4: #{tpu_custom_call.1} parent=1 // pred_region
      %s16 = ssub.s32 128, 128
      %17 = vsyncadd [#allocation3], %s16
      %s19 = sshll.u32 [#allocation2], 4
      %s20 = int_to_ptr.vmem [resolvable:$true] %s19
      %22 = dma.hbm_to_vmem [thread:$0]  %s0, 128, %s20, [#allocation3]
    $region5: #{tpu_custom_call.1} parent=1 // pred_fallthru
      _
    // Predicated region
    $region6: #{tpu_custom_call.1} parent=1 // pred_check
      _
    $region7: #{tpu_custom_call.1} parent=1 // pred_check_branch
      %24 = sbr.rel (0) target = $region9
    $region8: #{tpu_custom_call.1} parent=1 // pred_region
      %s26 = ssub.s32 2048, 2048
      %27 = vsyncadd [#allocation6], %s26
      %s28 = sshll.u32 [#allocation5], 4
      %s29 = int_to_ptr.vmem [resolvable:$true] %s28
      %34 = dma.hbm_to_vmem [thread:$0]  %s1, 2048, %s29, [#allocation6], 128, 128, 8
    $region9: #{tpu_custom_call.1} parent=1 // pred_fallthru
      _
    // Predicated region
    $region10: #{tpu_custom_call.1} parent=1 // pred_check
      _
    $region11: #{tpu_custom_call.1} parent=1 // pred_check_branch
      %36 = sbr.rel (0) target = $region13
    $region12: #{tpu_custom_call.1} parent=1 // pred_region
      _
    $region13: #{tpu_custom_call.1} parent=1 // pred_fallthru
      _
    // Predicated region
    $region14: #{tpu_custom_call.1} parent=1 // pred_check
      _
    $region15: #{tpu_custom_call.1} parent=1 // pred_check_branch
      %38 = sbr.rel (0) target = $region17
    $region16: #{tpu_custom_call.1} parent=1 // pred_region
      _
    $region17: #{tpu_custom_call.1} parent=1 // pred_fallthru
      _
    // Predicated region
    $region18: #{tpu_custom_call.1} parent=1 // pred_check
      _
    $region19: #{tpu_custom_call.1} parent=1 // pred_check_branch
      %40 = sbr.rel (0) target = $region21
    $region20: #{tpu_custom_call.1} parent=1 // pred_region
      _
    $region21: #{tpu_custom_call.1} parent=1 // pred_fallthru
      _
    // Predicated region
    $region22: #{tpu_custom_call.1} parent=1 // pred_check
      _
    $region23: #{tpu_custom_call.1} parent=1 // pred_check_branch
      %42 = sbr.rel (0) target = $region25
    $region24: #{tpu_custom_call.1} parent=1 // pred_region
      %43 = dma.done [#allocation3], 128
    $region25: #{tpu_custom_call.1} parent=1 // pred_fallthru
      _
    // Predicated region
    $region26: #{tpu_custom_call.1} parent=1 // pred_check
      _
    $region27: #{tpu_custom_call.1} parent=1 // pred_check_branch
      %45 = sbr.rel (0) target = $region29
    $region28: #{tpu_custom_call.1} parent=1 // pred_region
      %46 = dma.done [#allocation6], 2048
    $region29: #{tpu_custom_call.1} parent=1 // pred_fallthru
      _
    %v47 = vld [vmem:[#allocation2] sm:$0xff]
    %v48 = vld [vmem:[#allocation5] sm:$0xff]
    %v49 = vld [vmem:[#allocation5 + $0x8] sm:$0xff]
    %v50 = vld [vmem:[#allocation5 + $0x10] sm:$0xff]
    %v51 = vld [vmem:[#allocation5 + $0x18] sm:$0xff]
    %v52 = vld [vmem:[#allocation5 + $0x20] sm:$0xff]
    %v53 = vld [vmem:[#allocation5 + $0x28] sm:$0xff]
    %v54 = vld [vmem:[#allocation5 + $0x30] sm:$0xff]
    %v55 = vld [vmem:[#allocation5 + $0x38] sm:$0xff]
    %v56 = vld [vmem:[#allocation5 + $0x40] sm:$0xff]
    %v57 = vld [vmem:[#allocation5 + $0x48] sm:$0xff]
    %v58 = vld [vmem:[#allocation5 + $0x50] sm:$0xff]
    %v59 = vld [vmem:[#allocation5 + $0x58] sm:$0xff]
    %v60 = vld [vmem:[#allocation5 + $0x60] sm:$0xff]
    %v61 = vld [vmem:[#allocation5 + $0x68] sm:$0xff]
    %v62 = vld [vmem:[#allocation5 + $0x70] sm:$0xff]
    %v63 = vld [vmem:[#allocation5 + $0x78] sm:$0xff]
    %v64 = vld [vmem:[%s2] sm:$0x1]
    %v66 = vlaneseq
    %v67 = vshrl.u32 %v66, 7
    %v68 = vsub.s32 0, %v67
    %v69 = vrot.slane %v64, %v68
    %71 = vmatprep.subr.mxu0 0.0
    %72 = vmatpush1.msra.mxu0 %v48
    %73 = vmatprep.subr.mxu0 0.0
    %74 = vmatpush1.msra.mxu0 %v49
    %75 = vmatprep.subr.mxu0 0.0
    %76 = vmatpush1.msra.mxu0 %v50
    %77 = vmatprep.subr.mxu0 0.0
    %78 = vmatpush1.msra.mxu0 %v51
    %79 = vmatprep.subr.mxu0 0.0
    %80 = vmatpush1.msra.mxu0 %v52
    %81 = vmatprep.subr.mxu0 0.0
    %82 = vmatpush1.msra.mxu0 %v53
    %83 = vmatprep.subr.mxu0 0.0
    %84 = vmatpush1.msra.mxu0 %v54
    %85 = vmatprep.subr.mxu0 0.0
    %86 = vmatpush1.msra.mxu0 %v55
    %87 = vmatprep.subr.mxu0 0.0
    %88 = vmatpush1.msra.mxu0 %v56
    %89 = vmatprep.subr.mxu0 0.0
    %90 = vmatpush1.msra.mxu0 %v57
    %91 = vmatprep.subr.mxu0 0.0
    %92 = vmatpush1.msra.mxu0 %v58
    %93 = vmatprep.subr.mxu0 0.0
    %94 = vmatpush1.msra.mxu0 %v59
    %95 = vmatprep.subr.mxu0 0.0
    %96 = vmatpush1.msra.mxu0 %v60
    %97 = vmatprep.subr.mxu0 0.0
    %98 = vmatpush1.msra.mxu0 %v61
    %99 = vmatprep.subr.mxu0 0.0
    %100 = vmatpush1.msra.mxu0 %v62
    %101 = vmatprep.subr.mxu0 0.0
    %102 = vmatpush1.msra.mxu0 %v63
    %103 = vmatprep.subr.mxu0 0.0
    %104 = vmatpush1.msra.mxu0 0.0
    %105 = vmatprep.subr.mxu0 0.0
    %106 = vmatpush1.msra.mxu0 0.0
    %107 = vmatprep.subr.mxu0 0.0
    %108 = vmatpush1.msra.mxu0 0.0
    %109 = vmatprep.subr.mxu0 0.0
    %110 = vmatpush1.msra.mxu0 0.0
    %111 = vmatprep.subr.mxu0 0.0
    %112 = vmatpush1.msra.mxu0 0.0
    %113 = vmatprep.subr.mxu0 0.0
    %114 = vmatpush1.msra.mxu0 0.0
    %115 = vmatprep.subr.mxu0 0.0
    %116 = vmatpush1.msra.mxu0 0.0
    %117 = vmatprep.subr.mxu0 0.0
    %118 = vmatpush1.msra.mxu0 0.0
    %119 = vmatprep.subr.mxu0 0.0
    %120 = vmatpush1.msra.mxu0 0.0
    %121 = vmatprep.subr.mxu0 0.0
    %122 = vmatpush1.msra.mxu0 0.0
    %123 = vmatprep.subr.mxu0 0.0
    %124 = vmatpush1.msra.mxu0 0.0
    %125 = vmatprep.subr.mxu0 0.0
    %126 = vmatpush1.msra.mxu0 0.0
    %127 = vmatprep.subr.mxu0 0.0
    %128 = vmatpush1.msra.mxu0 0.0
    %129 = vmatprep.subr.mxu0 0.0
    %130 = vmatpush1.msra.mxu0 0.0
    %131 = vmatprep.subr.mxu0 0.0
    %132 = vmatpush1.msra.mxu0 0.0
    %133 = vmatprep.subr.mxu0 0.0
    %134 = vmatpush1.msra.mxu0 0.0
    %135 = vmatprep.mubr.f32.mxu0 0.0
    %136 = vmatmul.mubr.f32.gmra.mrb[0].mxu0 %v47
    %v137 = vpop.f32.mrb[0].mxu0
    %v138 = vadd.f32 %v69, %v137
    %v139 = vpop.f32.mrb[0].mxu0
    %140 = vdwg.mxu0
    %v141 = vmax.f32 %v138, 0.0
    %v142 = vld [vmem:[%s3] sm:$0x1]
    %v143 = vld [vmem:[%s4] sm:$0x1]
    %144 = vadd.xlane.f32.xlu0 %v141
    %v145 = vpop.xlane.xlu0 %144
    %v146 = vmul.f32 %v141, %v141
    %147 = vadd.xlane.f32.xlu0 %v146
    %v148 = vpop.xlane.xlu0 %147
    %v149 = vmul.f32 %v145, 0.0078125
    %v150 = vmul.f32 %v148, 0.0078125
    %v151 = vmul.f32 %v149, %v149
    %v152 = vsub.f32 %v150, %v151
    %v153 = vmax.f32 %v152, 0.0
    %v154 = vadd.f32 %v153, 1e-05
    %v155 = vrsqrt.pop %v154
    %v156 = vsub.f32 %v141, %v149
    %v157 = vmul.f32 %v156, %v155
    %v159 = vlaneseq
    %v160 = vshrl.u32 %v159, 7
    %v161 = vsub.s32 0, %v160
    %v162 = vrot.slane %v142, %v161
    %v164 = vmul.f32 %v157, %v162
    %v166 = vlaneseq
    %v167 = vshrl.u32 %v166, 7
    %v168 = vsub.s32 0, %v167
    %v169 = vrot.slane %v143, %v168
    %v171 = vadd.f32 %v164, %v169
    %172 = vst [vmem:[#allocation7] sm:$0xff] %v171
    // Predicated region
    $region30: #{tpu_custom_call.1} parent=1 // pred_check
      _
    $region31: #{tpu_custom_call.1} parent=1 // pred_check_branch
      %174 = sbr.rel (0) target = $region33
    $region32: #{tpu_custom_call.1} parent=1 // pred_region
      %s176 = ssub.s32 128, 128
      %177 = vsyncadd [#allocation4], %s176
      %s179 = sshll.u32 [#allocation7], 4
      %s180 = int_to_ptr.vmem [resolvable:$true] %s179
      %182 = dma.vmem_to_hbm [thread:$0]  %s180, 128, %s5, [#allocation4]
    $region33: #{tpu_custom_call.1} parent=1 // pred_fallthru
      _
    // Predicated region
    $region34: #{tpu_custom_call.1} parent=1 // pred_check
      _
    $region35: #{tpu_custom_call.1} parent=1 // pred_check_branch
      %184 = sbr.rel (0) target = $region37
    $region36: #{tpu_custom_call.1} parent=1 // pred_region
      %185 = dma.done [#allocation4], 128
    $region37: #{tpu_custom_call.1} parent=1 // pred_fallthru
      _
    %186 = vsyncpa [#allocation3], 1
    %187 = vsyncpa [#allocation6], 1
    %188 = vsyncpa [#allocation4], 1

</llo_original>
